<compile_context>
chip_gen: v5e
topology: v5e:2x2
jax: 0.10.0
libtpu: 0.0.40
codegen_flags: <defaults>
</compile_context>

<pallas_src>
import math
from functools import partial
from typing import NamedTuple

import jax
import jax.numpy as jnp
from jax import lax
from jax.experimental import pallas as pl
from jax.experimental.pallas import tpu as pltpu


def _num_teacher_actions() -> int:
    # Reproduce the reference list comprehension (including its float == 1
    # behaviour) to get len(A) exactly as Python/PyTorch would compute it.
    vals = (0, 0.1, 0.2, 0.3, 0.4, 0.5, 0.6, 0.7, 0.8, 0.9, 1)
    return sum(1 for r in vals for g in vals for pd in vals if r + g + pd == 1)


def _round_up(x: int, m: int) -> int:
    return ((x + m - 1) // m) * m


class PackedParams(NamedTuple):
    buf: jax.Array        # (rows, L) float32 packed parameter slab
    n_actions: int        # valid output lanes
    hidden_dim: int       # valid hidden lanes


# ---------------------------------------------------------------------------
# Parameter packing (wrapper side, done once per weight update).
#
# Packed layout, lane width L = max(round_up(hidden,128), round_up(n_act,128)):
#   rows 0 .. L-1 : w2 zero-padded to (L, L)   (rows >= hidden are zero)
#   row  L        : b2 zero-padded to (1, L)
#   row  L+1      : w1[0, :] zero-padded to (1, L)
#   row  L+2      : w1[1, :] zero-padded to (1, L)
#   row  L+3      : b1 zero-padded to (1, L)
#   remaining rows (to a multiple of 8): zeros
# Zero padding of w1/b1 keeps the padded lanes of h exactly 0 after ReLU, so
# the full (B,L) @ (L,L) matmul is numerically identical to the unpadded one.
# ---------------------------------------------------------------------------
def pack_params(w1, b1, w2, b2) -> PackedParams:
    """w1 (2,H), b1 (H,), w2 (H,N), b2 (N,) -> PackedParams."""
    H = w1.shape[1]
    N = w2.shape[1]
    L = max(_round_up(H, 128), _round_up(N, 128))
    rows = _round_up(L + 4, 8)
    P = jnp.zeros((rows, L), jnp.float32)
    P = P.at[:H, :N].set(w2.astype(jnp.float32))
    P = P.at[L, :N].set(b2.astype(jnp.float32))
    P = P.at[L + 1, :H].set(w1[0].astype(jnp.float32))
    P = P.at[L + 2, :H].set(w1[1].astype(jnp.float32))
    P = P.at[L + 3, :H].set(b1.astype(jnp.float32))
    return PackedParams(P, N, H)


# ---------------------------------------------------------------------------
# Shared in-kernel math.
# ---------------------------------------------------------------------------
def _qvalues(x, p_ref, mxu_bf16):
    L = p_ref.shape[1]                       # static lane-padded width

    # fc1 + ReLU on the VPU: K=2, so two broadcast FMAs beat an MXU pass.
    w1a = p_ref[L + 1:L + 2, :]              # (1, L)
    w1b = p_ref[L + 2:L + 3, :]              # (1, L)
    b1 = p_ref[L + 3:L + 4, :]               # (1, L)
    h = jnp.maximum(x[:, 0:1] * w1a + x[:, 1:2] * w1b + b1, 0.0)   # (B, L)

    # fc2 on the MXU. Padded lanes of h are exactly zero, and padded rows of
    # w2 are zero, so the padded matmul equals the unpadded one.
    w2 = p_ref[0:L, :]                       # (L, L)
    b2 = p_ref[L:L + 1, :]                   # (1, L)
    if mxu_bf16:
        out = jnp.dot(h.astype(jnp.bfloat16), w2.astype(jnp.bfloat16),
                      preferred_element_type=jnp.float32) + b2
    else:
        out = jnp.dot(h, w2, preferred_element_type=jnp.float32) + b2
    return out                               # (B, L) f32


def _teacherq_kernel(x_ref, p_ref, o_ref, *, mxu_bf16):
    out = _qvalues(x_ref[...], p_ref, mxu_bf16)
    o_ref[...] = out.astype(o_ref.dtype)


def _teacherq_greedy_kernel(x_ref, p_ref, a_ref, *, mxu_bf16, n_actions):
    # Fused argmax over actions: never writes the (B, 128) Q matrix to HBM.
    out = _qvalues(x_ref[...], p_ref, mxu_bf16)          # (B, L) f32
    L = p_ref.shape[1]
    lane = lax.broadcasted_iota(jnp.int32, out.shape, 1)  # (B, L)
    masked = jnp.where(lane < n_actions, out, -jnp.inf)   # hide padded lanes
    m = jnp.max(masked, axis=-1, keepdims=True)            # (B, 1)
    idx_f = jnp.where(masked == m, lane.astype(jnp.float32), float(L))
    a_ref[...] = jnp.min(idx_f, axis=-1, keepdims=True).astype(jnp.int32)


# ---------------------------------------------------------------------------
# Small-batch path: gridless, whole arrays resident in VMEM (2 input DMAs).
# ---------------------------------------------------------------------------
def teacherq_forward(x, params: PackedParams, *, mxu_bf16=False,
                     slice_output=True, out_dtype=jnp.float32):
    """x: (B, 2) -> (B, n_actions) (or lane-padded (B, L) if slice_output=False)."""
    B = x.shape[0]
    L = params.buf.shape[1]
    out = pl.pallas_call(
        partial(_teacherq_kernel, mxu_bf16=mxu_bf16),
        out_shape=jax.ShapeDtypeStruct((B, L), out_dtype),
        in_specs=[
            pl.BlockSpec(memory_space=pltpu.MemorySpace.VMEM),
            pl.BlockSpec(memory_space=pltpu.MemorySpace.VMEM),
        ],
        out_specs=pl.BlockSpec(memory_space=pltpu.MemorySpace.VMEM),
    )(x.astype(jnp.float32), params.buf)
    if slice_output:
        return out[:, :params.n_actions]
    return out


# ---------------------------------------------------------------------------
# Fused greedy-action path (the usual consumer of a Q-network): argmax over
# actions is done in-kernel, so the writeback is (B, 1) int32 instead of a
# full (B, 128) f32 Q matrix plus a separate XLA slice/argmax kernel.
# ---------------------------------------------------------------------------
def teacherq_greedy_action(x, params: PackedParams, *, mxu_bf16=False):
    """x: (B, 2) -> (B,) int32 greedy action indices."""
    B = x.shape[0]
    act = pl.pallas_call(
        partial(_teacherq_greedy_kernel, mxu_bf16=mxu_bf16,
                n_actions=params.n_actions),
        out_shape=jax.ShapeDtypeStruct((B, 1), jnp.int32),
        in_specs=[
            pl.BlockSpec(memory_space=pltpu.MemorySpace.VMEM),
            pl.BlockSpec(memory_space=pltpu.MemorySpace.VMEM),
        ],
        out_specs=pl.BlockSpec(memory_space=pltpu.MemorySpace.VMEM),
    )(x.astype(jnp.float32), params.buf)
    return act[:, 0]


# ---------------------------------------------------------------------------
# Large-batch path (RL training loop): grid over batch tiles, packed params
# stay VMEM-resident (constant index_map -> Pallas skips re-DMA).
#   * block_b defaults to 1024 rows/step (~85% of HBM roofline vs ~30% at 128).
#   * On v7x pass core_parallel=True (CORE_PARALLEL actually shards the grid
#     across the 2 TensorCores; plain "parallel" does not) and pick block_b so
#     the number of tiles is even.
# ---------------------------------------------------------------------------
def teacherq_forward_batched(x, params: PackedParams, *, block_b=1024,
                             mxu_bf16=False, slice_output=True,
                             out_dtype=jnp.float32, core_parallel=False):
    B = x.shape[0]
    L = params.buf.shape[1]
    nb = pl.cdiv(B, block_b)
    Bp = nb * block_b
    xf = x.astype(jnp.float32)
    if Bp != B:
        xf = jnp.pad(xf, ((0, Bp - B), (0, 0)))
    sem = (pltpu.CORE_PARALLEL,) if core_parallel else ("parallel",)
    out = pl.pallas_call(
        partial(_teacherq_kernel, mxu_bf16=mxu_bf16),
        out_shape=jax.ShapeDtypeStruct((Bp, L), out_dtype),
        grid_spec=pltpu.PrefetchScalarGridSpec(
            num_scalar_prefetch=0,
            grid=(nb,),
            in_specs=[
                pl.BlockSpec((block_b, 2), lambda i: (i, 0)),
                # Constant block index: params DMA'd once, VMEM-resident.
                pl.BlockSpec(params.buf.shape, lambda i: (0, 0)),
            ],
            out_specs=pl.BlockSpec((block_b, L), lambda i: (i, 0)),
        ),
        compiler_params=pltpu.CompilerParams(dimension_semantics=sem),
    )(xf, params.buf)
    if slice_output:
        return out[:B, :params.n_actions]
    return out          # lane-padded (Bp, L); rows >= B are padding


def init_params(hidden_dim: int, n_actions: int, key):
    """Deterministic init mimicking PyTorch Linear's U(-1/sqrt(fan_in), ...)."""
    k1, k2, k3, k4 = jax.random.split(key, 4)
    bound1 = 1.0 / math.sqrt(2.0)
    bound2 = 1.0 / math.sqrt(hidden_dim)
    w1 = jax.random.uniform(k1, (2, hidden_dim), jnp.float32, -bound1, bound1)
    b1 = jax.random.uniform(k2, (hidden_dim,), jnp.float32, -bound1, bound1)
    w2 = jax.random.uniform(k3, (hidden_dim, n_actions), jnp.float32,
                            -bound2, bound2)
    b2 = jax.random.uniform(k4, (n_actions,), jnp.float32, -bound2, bound2)
    return w1, b1, w2, b2


def _reference(x, w1, b1, w2, b2):
    return jnp.maximum(x @ w1 + b1[None, :], 0.0) @ w2 + b2[None, :]


if __name__ == "__main__":
    hidden_dim = 32
    batch = 8
    n_actions = _num_teacher_actions()  # len(A), float-== semantics preserved

    key = jax.random.PRNGKey(0)
    kx, kp, kxb = jax.random.split(key, 3)
    x = jax.random.normal(kx, (batch, 2), jnp.float32)
    w1, b1, w2, b2 = init_params(hidden_dim, n_actions, kp)
    params = pack_params(w1, b1, w2, b2)
    ref = _reference(x, w1, b1, w2, b2)

    # Small-batch (gridless) path, f32 MXU.
    out = jax.block_until_ready(teacherq_forward(x, params))
    assert out.shape == (batch, n_actions)
    assert jnp.allclose(out, ref, atol=1e-5, rtol=1e-5)

    # Small-batch path, bf16 MXU (f32 accumulate) — looser tolerance.
    out_bf = jax.block_until_ready(teacherq_forward(x, params, mxu_bf16=True))
    assert jnp.allclose(out_bf, ref, atol=5e-2, rtol=5e-2)

    # Fused greedy-action path (argmax fused in-kernel): must agree with the
    # argmax of the Pallas Q-values (identical in-kernel math).
    act = jax.block_until_ready(teacherq_greedy_action(x, params))
    assert act.shape == (batch,)
    assert jnp.array_equal(act, jnp.argmax(out, axis=-1).astype(jnp.int32))

    # Batched path (training loop): big tile (default block_b=1024).
    xb = jax.random.normal(kxb, (300, 2), jnp.float32)
    outb = jax.block_until_ready(teacherq_forward_batched(xb, params))
    refb = _reference(xb, w1, b1, w2, b2)
    assert outb.shape == (300, n_actions)
    assert jnp.allclose(outb, refb, atol=1e-5, rtol=1e-5)

    # Batched path returning the lane-padded buffer (no post-kernel slice).
    outp = jax.block_until_ready(
        teacherq_forward_batched(xb, params, slice_output=False))
    assert outp.shape[1] == params.buf.shape[1]
    assert jnp.allclose(outp[:300, :n_actions], refb, atol=1e-5, rtol=1e-5)

    print("KERNEL_OK")
</pallas_src>

<mosaic_0001>
module attributes {stable_mosaic.version = 11 : i64} {
  func.func @_teacherq_kernel(%arg0: memref<8x2xf32, #tpu.memory_space<vmem>>, %arg1: memref<136x128xf32, #tpu.memory_space<vmem>>, %arg2: memref<8x128xf32, #tpu.memory_space<vmem>>) attributes {dimension_semantics = [], scalar_prefetch = 0 : i64, scratch_operands = 0 : i64, tpu.core_type = #tpu.core_type<tc>} {
    %c0 = arith.constant 0 : index
    %c0_0 = arith.constant 0 : index
    %0 = vector.load %arg0[%c0, %c0_0] : memref<8x2xf32, #tpu.memory_space<vmem>>, vector<8x2xf32>
    %c129 = arith.constant 129 : index
    %c0_1 = arith.constant 0 : index
    %1 = vector.load %arg1[%c129, %c0_1] : memref<136x128xf32, #tpu.memory_space<vmem>>, vector<1x128xf32>
    %c130 = arith.constant 130 : index
    %c0_2 = arith.constant 0 : index
    %2 = vector.load %arg1[%c130, %c0_2] : memref<136x128xf32, #tpu.memory_space<vmem>>, vector<1x128xf32>
    %c131 = arith.constant 131 : index
    %c0_3 = arith.constant 0 : index
    %3 = vector.load %arg1[%c131, %c0_3] : memref<136x128xf32, #tpu.memory_space<vmem>>, vector<1x128xf32>
    %4 = vector.extract_strided_slice %0 {offsets = [0, 0], sizes = [8, 1], strides = [1, 1]} : vector<8x2xf32> to vector<8x1xf32>
    %5 = vector.broadcast %4 : vector<8x1xf32> to vector<8x128xf32>
    %6 = vector.broadcast %1 : vector<1x128xf32> to vector<8x128xf32>
    %7 = arith.mulf %5, %6 : vector<8x128xf32>
    %8 = vector.extract_strided_slice %0 {offsets = [0, 1], sizes = [8, 1], strides = [1, 1]} : vector<8x2xf32> to vector<8x1xf32>
    %9 = vector.broadcast %8 : vector<8x1xf32> to vector<8x128xf32>
    %10 = vector.broadcast %2 : vector<1x128xf32> to vector<8x128xf32>
    %11 = arith.mulf %9, %10 : vector<8x128xf32>
    %12 = arith.addf %7, %11 : vector<8x128xf32>
    %13 = vector.broadcast %3 : vector<1x128xf32> to vector<8x128xf32>
    %14 = arith.addf %12, %13 : vector<8x128xf32>
    %cst = arith.constant 0.000000e+00 : f32
    %15 = vector.broadcast %cst : f32 to vector<8x128xf32>
    %16 = arith.maximumf %14, %15 : vector<8x128xf32>
    %c0_4 = arith.constant 0 : index
    %c0_5 = arith.constant 0 : index
    %17 = vector.load %arg1[%c0_4, %c0_5] : memref<136x128xf32, #tpu.memory_space<vmem>>, vector<128x128xf32>
    %c128 = arith.constant 128 : index
    %c0_6 = arith.constant 0 : index
    %18 = vector.load %arg1[%c128, %c0_6] : memref<136x128xf32, #tpu.memory_space<vmem>>, vector<1x128xf32>
    %cst_7 = arith.constant dense<0.000000e+00> : vector<8x128xf32>
    %19 = tpu.matmul %16, %17, %cst_7 {dimension_numbers = #tpu.dot_dimension_numbers<[1], [0], [0], [1], [0, 0, 1, 1], [], []>} : vector<8x128xf32>, vector<128x128xf32>, vector<8x128xf32> -> vector<8x128xf32>
    %20 = vector.broadcast %18 : vector<1x128xf32> to vector<8x128xf32>
    %21 = arith.addf %19, %20 : vector<8x128xf32>
    %c0_8 = arith.constant 0 : index
    %c0_9 = arith.constant 0 : index
    %22 = vector.load %arg2[%c0_8, %c0_9] : memref<8x128xf32, #tpu.memory_space<vmem>>, vector<8x128xf32>
    tpu.vector_store %arg2[%c0_8, %c0_9], %21 {strides = array<i32>} : memref<8x128xf32, #tpu.memory_space<vmem>>, vector<8x128xf32>,
    return
  }
}

</mosaic_0001>

<llo_original>
// kernel: tpu_custom_call.1
$region0: #{tpu_custom_call.1}
  #allocation0 [shape = 'u32[]', space=smem, size = 0x4, offset = 0x4, fixed_abs, tag = 'smem constant byte address 0x4 - core index']
  #allocation1 [shape = 'u32[72,128]{1,0:T(1,128)}', space=vmem, size = 0x9000, scoped, tag = 'internal scratch']
  %s0 = inlined_call_operand.vmem [shape: f32[8,2], index: 0, kind: input, shape index: {}]
  %s1 = inlined_call_operand.hbm [shape: f32[136,128], index: 1, kind: input, shape index: {}]
  %s2 = inlined_call_operand.hbm [shape: f32[8,128], index: 2, kind: output, shape index: {}]
  %s3 = sld [smem:[#allocation0]]
  $region22: #{tpu_custom_call.1} parent=0
    _
  %s5 = ssub.s32 1, %s3
  %s6 = scalar_select 0, %s5, %s3
  $region1: #{tpu_custom_call.1} parent=0
    #allocation2 [shape = 'u8[69632]{0}', space=vmem, size = 0x11000, scoped, tag = 'input window, operand 1, single buffered']
    #allocation3 [shape = 's32[1]{0}', space=sflag, size = 0x4, scoped, tag = 'scoped memory for tpu_custom_call.1']
    #allocation4 [shape = 's32[1]{0}', space=sflag, size = 0x4, scoped, tag = 'scoped memory for tpu_custom_call.1']
    #allocation5 [shape = 'u8[4096]{0}', space=vmem, size = 0x1000, scoped, tag = 'output window, operand 0, single buffered']
    %7 = vsyncpa [#allocation3], 0
    %8 = vsyncpa [#allocation4], 0
    // Predicated region
    $region2: #{tpu_custom_call.1} parent=1 // pred_check
      _
    $region3: #{tpu_custom_call.1} parent=1 // pred_check_branch
      %10 = sbr.rel (0) target = $region5
    $region4: #{tpu_custom_call.1} parent=1 // pred_region
      _
    $region5: #{tpu_custom_call.1} parent=1 // pred_fallthru
      _
    // Predicated region
    $region6: #{tpu_custom_call.1} parent=1 // pred_check
      _
    $region7: #{tpu_custom_call.1} parent=1 // pred_check_branch
      %12 = sbr.rel (0) target = $region9
    $region8: #{tpu_custom_call.1} parent=1 // pred_region
      %14 = vsyncadd [#allocation3], 0
      %s15 = sshll.u32 %s1, 4
      %s16 = int_to_ptr.hbm [resolvable:$true] %s15
      %s17 = sshll.u32 [#allocation2], 4
      %s18 = int_to_ptr.vmem [resolvable:$true] %s17
      %23 = dma.hbm_to_vmem [thread:$0]  %s16, 2176, %s18, [#allocation3], 128, 128, 8
    $region9: #{tpu_custom_call.1} parent=1 // pred_fallthru
      _
    // Predicated region
    $region10: #{tpu_custom_call.1} parent=1 // pred_check
      _
    $region11: #{tpu_custom_call.1} parent=1 // pred_check_branch
      %25 = sbr.rel (0) target = $region13
    $region12: #{tpu_custom_call.1} parent=1 // pred_region
      %27 = dma.done [#allocation3], 2176
    $region13: #{tpu_custom_call.1} parent=1 // pred_fallthru
      _
    %v28 = vld [vmem:[%s0] sm:$0xff]
    %v29 = vld [vmem:[#allocation2 + $0x81] sm:$0x1]
    %v30 = vld [vmem:[#allocation2 + $0x82] sm:$0x1]
    %v31 = vld [vmem:[#allocation2 + $0x83] sm:$0x1]
    %33 = vset.pattern.permute.xlu0 0
    %34 = vperm.xlu0 %33, %v28
    %v35 = vpop.permute.xlu0 %34
    %v37 = vperm.slane %v29, 0
    %v38 = vmul.f32 %v35, %v37
    %39 = vset.pattern.permute.xlu0 1
    %40 = vperm.xlu0 %39, %v28
    %v41 = vpop.permute.xlu0 %40
    %v43 = vperm.slane %v30, 0
    %v44 = vmul.f32 %v41, %v43
    %v45 = vadd.f32 %v38, %v44
    %v46 = vperm.slane %v31, 0
    %v47 = vadd.f32 %v45, %v46
    %v48 = vmax.f32 %v47, 0.0
    %v49 = vld [vmem:[#allocation2] sm:$0xff]
    %v50 = vld [vmem:[#allocation2 + $0x8] sm:$0xff]
    %v51 = vld [vmem:[#allocation2 + $0x10] sm:$0xff]
    %v52 = vld [vmem:[#allocation2 + $0x18] sm:$0xff]
    %v53 = vld [vmem:[#allocation2 + $0x20] sm:$0xff]
    %v54 = vld [vmem:[#allocation2 + $0x28] sm:$0xff]
    %v55 = vld [vmem:[#allocation2 + $0x30] sm:$0xff]
    %v56 = vld [vmem:[#allocation2 + $0x38] sm:$0xff]
    %v57 = vld [vmem:[#allocation2 + $0x40] sm:$0xff]
    %v58 = vld [vmem:[#allocation2 + $0x48] sm:$0xff]
    %v59 = vld [vmem:[#allocation2 + $0x50] sm:$0xff]
    %v60 = vld [vmem:[#allocation2 + $0x58] sm:$0xff]
    %v61 = vld [vmem:[#allocation2 + $0x60] sm:$0xff]
    %v62 = vld [vmem:[#allocation2 + $0x68] sm:$0xff]
    %v63 = vld [vmem:[#allocation2 + $0x70] sm:$0xff]
    %v64 = vld [vmem:[#allocation2 + $0x78] sm:$0xff]
    %v65 = vld [vmem:[#allocation2 + $0x80] sm:$0x1]
    %v66 = vperm.slane %v65, 0
    %67 = vmatpush.msra.mxu0 %v64
    %68 = vmatpush.msra.mxu0 %v63
    %69 = vmatpush.msra.mxu0 %v62
    %70 = vmatpush.msra.mxu0 %v61
    %71 = vmatpush.msra.mxu0 %v60
    %72 = vmatpush.msra.mxu0 %v59
    %73 = vmatpush.msra.mxu0 %v58
    %74 = vmatpush.msra.mxu0 %v57
    %75 = vmatpush.msra.mxu0 %v56
    %76 = vmatpush.msra.mxu0 %v55
    %77 = vmatpush.msra.mxu0 %v54
    %78 = vmatpush.msra.mxu0 %v53
    %79 = vmatpush.msra.mxu0 %v52
    %80 = vmatpush.msra.mxu0 %v51
    %81 = vmatpush.msra.mxu0 %v50
    %82 = vmatpush.msra.mxu0 %v49
    %83 = vmatmul.f32.gmra.mxu0 %v48
    %v84 = vpop.f32.mrf.mxu0
    %v85 = vadd.f32 %v66, %v84
    %86 = vdwg.mxu0
    %87 = vst [vmem:[#allocation5] sm:$0xff] %v85
    // Predicated region
    $region14: #{tpu_custom_call.1} parent=1 // pred_check
      _
    $region15: #{tpu_custom_call.1} parent=1 // pred_check_branch
      %89 = sbr.rel (0) target = $region17
    $region16: #{tpu_custom_call.1} parent=1 // pred_region
      %91 = vsyncadd [#allocation4], 0
      %s93 = sshll.u32 [#allocation5], 4
      %s94 = int_to_ptr.vmem [resolvable:$true] %s93
      %s95 = sshll.u32 %s2, 4
      %s96 = int_to_ptr.hbm [resolvable:$true] %s95
      %98 = dma.vmem_to_hbm [thread:$0]  %s94, 128, %s96, [#allocation4]
    $region17: #{tpu_custom_call.1} parent=1 // pred_fallthru
      _
    // Predicated region
    $region18: #{tpu_custom_call.1} parent=1 // pred_check
      _
    $region19: #{tpu_custom_call.1} parent=1 // pred_check_branch
      %100 = sbr.rel (0) target = $region21
    $region20: #{tpu_custom_call.1} parent=1 // pred_region
      %102 = dma.done [#allocation4], 128
    $region21: #{tpu_custom_call.1} parent=1 // pred_fallthru
      _
    %103 = vsyncpa [#allocation3], 1
    %104 = vsyncpa [#allocation4], 1

</llo_original>
